<compile_context>
chip_gen: v7x
topology: tpu7x:2x2x1
jax: 0.10.0
libtpu: 0.0.40
codegen_flags: <defaults>
</compile_context>

<pallas_src>
import jax
import jax.numpy as jnp
import numpy as np
from jax.experimental import pallas as pl
from jax.experimental.pallas import tpu as pltpu


def _sigmoid_kernel(x_ref, y_ref, ljd_ref):
    out_dtype = y_ref.dtype
    x = x_ref[...].astype(jnp.float32)

    # Single transcendental chain:
    #   e        = exp(-|x|)                    (one exp)
    #   sigmoid  = 1/(1+e)  if x >= 0 else  e/(1+e)
    #   softplus(-x) = max(-x, 0) + log1p(e)    (one log1p)
    e = jnp.exp(-jnp.abs(x))
    inv_denom = 1.0 / (1.0 + e)                 # exact reciprocal (1e-5 tol)
    sig = jnp.where(x >= 0, inv_denom, e * inv_denom)
    sp_neg = jnp.maximum(-x, 0.0) + jnp.log1p(e)  # softplus(-x), stable

    finfo = jnp.finfo(out_dtype)
    tiny = jnp.float32(finfo.tiny)
    upper = jnp.float32(1.0) - jnp.float32(finfo.eps)

    y_ref[...] = jnp.clip(sig, tiny, upper).astype(out_dtype)
    # -softplus(-x) - softplus(x) = -(2 * softplus(-x) + x)
    ljd_ref[...] = (-(sp_neg + sp_neg + x)).astype(out_dtype)


def _round_up(a, b):
    return (a + b - 1) // b * b


def sigmoid_forward(x, *, row_tile=8192):
    """Forward of the Sigmoid flow. Returns (clamp(sigmoid(x)), log_jac_diag)."""
    orig_shape = x.shape
    dtype = x.dtype
    n = int(np.prod(orig_shape)) if len(orig_shape) else 1

    lane = 128
    # Sublane packing: 8 rows/vreg for 4-byte dtypes, 16 for 2-byte, 32 for 1-byte.
    sub = max(8, 32 // jnp.dtype(dtype).itemsize)

    x_flat = x.reshape(-1)
    pad = (-n) % lane                 # only pad up to a whole lane (<=127 elems)
    if pad:
        # sigmoid(0) = 0.5, finite ljd -> safe pad value; sliced off below.
        x_flat = jnp.pad(x_flat, (0, pad))
    rows = (n + pad) // lane
    x2d = x_flat.reshape(rows, lane)

    blk_rows = _round_up(min(int(row_tile), _round_up(rows, sub)), sub)
    grid = (pl.cdiv(rows, blk_rows),)     # ragged last block handled by Pallas
    spec = pl.BlockSpec((blk_rows, lane), lambda i: (i, 0))

    y2d, ljd2d = pl.pallas_call(
        _sigmoid_kernel,
        out_shape=(
            jax.ShapeDtypeStruct((rows, lane), dtype),
            jax.ShapeDtypeStruct((rows, lane), dtype),
        ),
        grid=grid,
        in_specs=[spec],
        out_specs=(spec, spec),
        compiler_params=pltpu.CompilerParams(
            dimension_semantics=("parallel",),
            # 3 arrays x 2 buffers x 4 MiB (f32, 8192x128) = 24 MiB live;
            # 48 MiB leaves headroom on v7x (64 MiB/TC) and is well within
            # v5e/v6e physical VMEM.
            vmem_limit_bytes=48 * 1024 * 1024,
        ),
    )(x2d)

    if pad:
        y = y2d.reshape(-1)[:n].reshape(orig_shape)
        ljd = ljd2d.reshape(-1)[:n].reshape(orig_shape)
    else:
        y = y2d.reshape(orig_shape)
        ljd = ljd2d.reshape(orig_shape)
    return y, ljd


if __name__ == "__main__":
    key = jax.random.PRNGKey(0)
    # NCHW-like small shape consistent with the flow module.
    x = jax.random.normal(key, (2, 4, 16, 16), dtype=jnp.float32)

    y, ljd = sigmoid_forward(x)
    y = jax.block_until_ready(y)
    ljd = jax.block_until_ready(ljd)

    # Pure-JAX reference check (matches the PyTorch module's forward).
    finfo = jnp.finfo(x.dtype)
    ref_y = jnp.clip(jax.nn.sigmoid(x), finfo.tiny, 1.0 - finfo.eps)
    ref_ljd = -jax.nn.softplus(-x) - jax.nn.softplus(x)

    assert y.shape == x.shape and ljd.shape == x.shape
    assert jnp.allclose(y, ref_y, atol=1e-5, rtol=1e-5)
    assert jnp.allclose(ljd, ref_ljd, atol=1e-5, rtol=1e-5)

    print("KERNEL_OK")
</pallas_src>

<mosaic_0001>
module attributes {stable_mosaic.version = 11 : i64} {
  func.func @_sigmoid_kernel(%arg0: i32, %arg1: memref<16x128xf32, #tpu.memory_space<vmem>>, %arg2: memref<16x128xf32, #tpu.memory_space<vmem>>, %arg3: memref<16x128xf32, #tpu.memory_space<vmem>>) attributes {dimension_semantics = [#tpu.dimension_semantics<parallel>], iteration_bounds = array<i64: 1>, scalar_prefetch = 0 : i64, scratch_operands = 0 : i64, tpu.core_type = #tpu.core_type<tc>, window_params = [{transform_indices = @transform_0, window_bounds = array<i64: 16, 128>}, {transform_indices = @transform_1, window_bounds = array<i64: 16, 128>}, {transform_indices = @transform_2, window_bounds = array<i64: 16, 128>}]} {
    %c0 = arith.constant 0 : index
    %c0_0 = arith.constant 0 : index
    %0 = vector.load %arg1[%c0, %c0_0] : memref<16x128xf32, #tpu.memory_space<vmem>>, vector<16x128xf32>
    %1 = math.absf %0 : vector<16x128xf32>
    %cst = arith.constant 0.000000e+00 : f32
    %2 = vector.broadcast %cst : f32 to vector<16x128xf32>
    %3 = arith.subf %2, %1 : vector<16x128xf32>
    %4 = math.exp %3 : vector<16x128xf32>
    %cst_1 = arith.constant 1.000000e+00 : f32
    %5 = vector.broadcast %cst_1 : f32 to vector<16x128xf32>
    %6 = arith.addf %5, %4 : vector<16x128xf32>
    %cst_2 = arith.constant 1.000000e+00 : f32
    %7 = vector.broadcast %cst_2 : f32 to vector<16x128xf32>
    %8 = arith.divf %7, %6 : vector<16x128xf32>
    %cst_3 = arith.constant 0.000000e+00 : f32
    %9 = vector.broadcast %cst_3 : f32 to vector<16x128xf32>
    %10 = arith.cmpf oge, %0, %9 : vector<16x128xf32>
    %11 = arith.mulf %4, %8 : vector<16x128xf32>
    %12 = arith.select %10, %8, %11 : vector<16x128xi1>, vector<16x128xf32>
    %cst_4 = arith.constant 0.000000e+00 : f32
    %13 = vector.broadcast %cst_4 : f32 to vector<16x128xf32>
    %14 = arith.subf %13, %0 : vector<16x128xf32>
    %cst_5 = arith.constant 0.000000e+00 : f32
    %15 = vector.broadcast %cst_5 : f32 to vector<16x128xf32>
    %16 = arith.maximumf %14, %15 : vector<16x128xf32>
    %17 = math.log1p %4 : vector<16x128xf32>
    %18 = arith.addf %16, %17 : vector<16x128xf32>
    %cst_6 = arith.constant 1.000000e+00 : f32
    %cst_7 = arith.constant 1.1920929E-7 : f32
    %19 = arith.subf %cst_6, %cst_7 : f32
    %cst_8 = arith.constant 1.17549435E-38 : f32
    %20 = vector.broadcast %cst_8 : f32 to vector<16x128xf32>
    %21 = arith.maximumf %20, %12 : vector<16x128xf32>
    %22 = vector.broadcast %19 : f32 to vector<16x128xf32>
    %23 = arith.minimumf %22, %21 : vector<16x128xf32>
    %c0_9 = arith.constant 0 : index
    %c0_10 = arith.constant 0 : index
    %24 = vector.load %arg2[%c0_9, %c0_10] : memref<16x128xf32, #tpu.memory_space<vmem>>, vector<16x128xf32>
    tpu.vector_store %arg2[%c0_9, %c0_10], %23 {strides = array<i32>} : memref<16x128xf32, #tpu.memory_space<vmem>>, vector<16x128xf32>,
    %25 = arith.addf %18, %18 : vector<16x128xf32>
    %26 = arith.addf %25, %0 : vector<16x128xf32>
    %cst_11 = arith.constant 0.000000e+00 : f32
    %27 = vector.broadcast %cst_11 : f32 to vector<16x128xf32>
    %28 = arith.subf %27, %26 : vector<16x128xf32>
    %c0_12 = arith.constant 0 : index
    %c0_13 = arith.constant 0 : index
    %29 = vector.load %arg3[%c0_12, %c0_13] : memref<16x128xf32, #tpu.memory_space<vmem>>, vector<16x128xf32>
    tpu.vector_store %arg3[%c0_12, %c0_13], %28 {strides = array<i32>} : memref<16x128xf32, #tpu.memory_space<vmem>>, vector<16x128xf32>,
    return
  }
  func.func @transform_0(%arg0: i32) -> (i32, i32) {
    %c0_i32 = arith.constant 0 : i32
    %c0_i32_0 = arith.constant 0 : i32
    return %arg0, %c0_i32 : i32, i32
  }
  func.func @transform_1(%arg0: i32) -> (i32, i32) {
    %c0_i32 = arith.constant 0 : i32
    %c0_i32_0 = arith.constant 0 : i32
    return %arg0, %c0_i32 : i32, i32
  }
  func.func @transform_2(%arg0: i32) -> (i32, i32) {
    %c0_i32 = arith.constant 0 : i32
    %c0_i32_0 = arith.constant 0 : i32
    return %arg0, %c0_i32 : i32, i32
  }
}

</mosaic_0001>

<llo_original>
// kernel: tpu_custom_call.1
$region0: #{tpu_custom_call.1}
  #allocation0 [shape = 'u32[]', space=smem, size = 0x4, offset = 0x4, fixed_abs, tag = 'smem constant byte address 0x4 - core index']
  #allocation1 [shape = 'u32[144,128]{1,0:T(1,128)}', space=vmem, size = 0x12000, scoped, tag = 'internal scratch']
  %s0 = inlined_call_operand.hbm [shape: f32[16,128], index: 0, kind: input, shape index: {}]
  %s1 = inlined_call_operand.hbm [shape: f32[16,128], index: 1, kind: output, shape index: {0}]
  %s2 = inlined_call_operand.hbm [shape: f32[16,128], index: 2, kind: output, shape index: {1}]
  %3 = xla_tuple %s1, %s2
  %s4 = sld [smem:[#allocation0]]
  $region26: #{tpu_custom_call.1} parent=0
    _
  %s6 = ssub.s32 1, %s4
  %s7 = scalar_select 0, %s6, %s4
  $region1: #{tpu_custom_call.1} parent=0
    #allocation2 [shape = 'u8[8192]{0}', space=vmem, size = 0x2000, scoped, tag = 'input window, operand 0, single buffered']
    #allocation3 [shape = 's32[1]{0}', space=sflag, size = 0x4, scoped, tag = 'scoped memory for tpu_custom_call.1']
    #allocation4 [shape = 's32[1]{0}', space=sflag, size = 0x4, scoped, tag = 'scoped memory for tpu_custom_call.1']
    #allocation5 [shape = 'u8[8192]{0}', space=vmem, size = 0x2000, scoped, tag = 'output window, operand 0, single buffered']
    #allocation6 [shape = 'u8[8192]{0}', space=vmem, size = 0x2000, scoped, tag = 'output window, operand 1, single buffered']
    #allocation7 [shape = 's32[1]{0}', space=sflag, size = 0x4, scoped, tag = 'scoped memory for tpu_custom_call.1']
    %8 = vsyncpa [#allocation3], 0
    %9 = vsyncpa [#allocation4], 0
    %10 = vsyncpa [#allocation7], 0
    // Predicated region
    $region2: #{tpu_custom_call.1} parent=1 // pred_check
      _
    $region3: #{tpu_custom_call.1} parent=1 // pred_check_branch
      %12 = sbr.rel (0) target = $region5
    $region4: #{tpu_custom_call.1} parent=1 // pred_region
      %s14 = ssub.s32 256, 256
      %15 = vsyncadd [#allocation3], %s14
      %s16 = sshll.u32 [#allocation2], 4
      %s17 = int_to_ptr.vmem [resolvable:$true] %s16
      %22 = dma.hbm_to_vmem [thread:$0]  %s0, 256, %s17, [#allocation3], 128, 128, 8
    $region5: #{tpu_custom_call.1} parent=1 // pred_fallthru
      _
    // Predicated region
    $region6: #{tpu_custom_call.1} parent=1 // pred_check
      _
    $region7: #{tpu_custom_call.1} parent=1 // pred_check_branch
      %24 = sbr.rel (0) target = $region9
    $region8: #{tpu_custom_call.1} parent=1 // pred_region
      %25 = dma.done [#allocation3], 256
    $region9: #{tpu_custom_call.1} parent=1 // pred_fallthru
      _
    %v26 = vld [vmem:[#allocation2] sm:$0xff]
    %v27 = vld [vmem:[#allocation2 + $0x8] sm:$0xff]
    %v28 = vand.u32 2147483647, %v26
    %v29 = vand.u32 2147483647, %v27
    %v30 = vsub.f32 0.0, %v28
    %v31 = vsub.f32 0.0, %v29
    %v32 = vmul.f32 %v30, 1.442695
    %v33 = vpow.pop %v32
    %v34 = vmul.f32 %v31, 1.442695
    %v35 = vpow.pop %v34
    %v36 = vadd.f32 %v33, 1.0
    %v37 = vadd.f32 %v35, 1.0
    %v38 = vrcp.pop %v36
    %v39 = vmul.f32 1.0, %v38
    %v40 = vrcp.pop %v37
    %v41 = vmul.f32 1.0, %v40
    %vm42 = vcmp.ge.f32.partialorder %v26, 0.0
    %vm43 = vcmp.ge.f32.partialorder %v27, 0.0
    %v44 = vmul.f32 %v33, %v39
    %v45 = vmul.f32 %v35, %v41
    %v46 = vsel %vm42, %v39, %v44
    %v47 = vsel %vm43, %v41, %v45
    %v48 = vsub.f32 0.0, %v26
    %v49 = vsub.f32 0.0, %v27
    %v50 = vmax.f32 %v48, 0.0
    %v51 = vmax.f32 %v49, 0.0
    %v52 = vadd.f32 %v33, 1.0
    %v53 = vlog2.pop %v52
    %v54 = vmul.f32 %v53, 0.6931472
    %v55 = vmul.f32 -0.5, %v33
    %v56 = vadd.f32 %v55, 1.0
    %v57 = vmul.f32 %v56, %v33
    %v58 = vand.u32 2147483647, %v33
    %vm59 = vcmp.lt.f32.partialorder %v58, 0.0004427343
    %v60 = vsel %vm59, %v57, %v54
    %v61 = vadd.f32 %v35, 1.0
    %v62 = vlog2.pop %v61
    %v63 = vmul.f32 %v62, 0.6931472
    %v64 = vmul.f32 -0.5, %v35
    %v65 = vadd.f32 %v64, 1.0
    %v66 = vmul.f32 %v65, %v35
    %v67 = vand.u32 2147483647, %v35
    %vm68 = vcmp.lt.f32.partialorder %v67, 0.0004427343
    %v69 = vsel %vm68, %v66, %v63
    %v70 = vadd.f32 %v50, %v60
    %v71 = vadd.f32 %v51, %v69
    %v72 = vmax.f32 %v46, 1.1754944e-38
    %v73 = vmax.f32 %v47, 1.1754944e-38
    %v74 = vmin.f32 %v72, 0.9999999
    %v75 = vmin.f32 %v73, 0.9999999
    %76 = vst [vmem:[#allocation5] sm:$0xff] %v74
    %77 = vst [vmem:[#allocation5 + $0x8] sm:$0xff] %v75
    %v78 = vadd.f32 %v70, %v70
    %v79 = vadd.f32 %v71, %v71
    %v80 = vadd.f32 %v78, %v26
    %v81 = vadd.f32 %v79, %v27
    %v82 = vsub.f32 0.0, %v80
    %v83 = vsub.f32 0.0, %v81
    %84 = vst [vmem:[#allocation6] sm:$0xff] %v82
    %85 = vst [vmem:[#allocation6 + $0x8] sm:$0xff] %v83
    // Predicated region
    $region10: #{tpu_custom_call.1} parent=1 // pred_check
      _
    $region11: #{tpu_custom_call.1} parent=1 // pred_check_branch
      %87 = sbr.rel (0) target = $region13
    $region12: #{tpu_custom_call.1} parent=1 // pred_region
      %s89 = ssub.s32 256, 256
      %90 = vsyncadd [#allocation4], %s89
      %s91 = sshll.u32 [#allocation5], 4
      %s92 = int_to_ptr.vmem [resolvable:$true] %s91
      %97 = dma.vmem_to_hbm [thread:$0]  %s92, 256, %s1, [#allocation4], 128, 128, 8
    $region13: #{tpu_custom_call.1} parent=1 // pred_fallthru
      _
    // Predicated region
    $region14: #{tpu_custom_call.1} parent=1 // pred_check
      _
    $region15: #{tpu_custom_call.1} parent=1 // pred_check_branch
      %99 = sbr.rel (0) target = $region17
    $region16: #{tpu_custom_call.1} parent=1 // pred_region
      %s101 = ssub.s32 256, 256
      %102 = vsyncadd [#allocation7], %s101
      %s103 = sshll.u32 [#allocation6], 4
      %s104 = int_to_ptr.vmem [resolvable:$true] %s103
      %109 = dma.vmem_to_hbm [thread:$0]  %s104, 256, %s2, [#allocation7], 128, 128, 8
    $region17: #{tpu_custom_call.1} parent=1 // pred_fallthru
      _
    // Predicated region
    $region18: #{tpu_custom_call.1} parent=1 // pred_check
      _
    $region19: #{tpu_custom_call.1} parent=1 // pred_check_branch
      %111 = sbr.rel (0) target = $region21
    $region20: #{tpu_custom_call.1} parent=1 // pred_region
      %112 = dma.done [#allocation4], 256
    $region21: #{tpu_custom_call.1} parent=1 // pred_fallthru
      _
    // Predicated region
    $region22: #{tpu_custom_call.1} parent=1 // pred_check
      _
    $region23: #{tpu_custom_call.1} parent=1 // pred_check_branch
      %114 = sbr.rel (0) target = $region25
    $region24: #{tpu_custom_call.1} parent=1 // pred_region
      %115 = dma.done [#allocation7], 256
    $region25: #{tpu_custom_call.1} parent=1 // pred_fallthru
      _
    %116 = vsyncpa [#allocation3], 1
    %117 = vsyncpa [#allocation4], 1
    %118 = vsyncpa [#allocation7], 1

</llo_original>
